<compile_context>
chip_gen: v7x
topology: tpu7x:2x2x1
jax: 0.10.0
libtpu: 0.0.40
codegen_flags: <defaults>
</compile_context>

<pallas_src>
import functools

import jax
import jax.numpy as jnp
from jax.experimental import pallas as pl
from jax.experimental.pallas import tpu as pltpu


def _round_up(x: int, m: int) -> int:
    return ((x + m - 1) // m) * m


def _context_gating_kernel(x_ref, wt_ref, b_ref, o_ref):
    # x_ref: (TM, F)  wt_ref: (F, F) [in, out]  b_ref: (1, F)  o_ref: (TM, F)
    x = x_ref[...]
    # Native-dtype operands straight to the MXU; accumulate in f32.
    lin = jnp.dot(x, wt_ref[...], preferred_element_type=jnp.float32)
    lin = lin + b_ref[...].astype(jnp.float32)
    sig = jax.nn.sigmoid(lin)                       # f32 gate math
    o_ref[...] = (x.astype(jnp.float32) * sig).astype(o_ref.dtype)


def prepare_params(weight, bias):
    """One-time parameter prep (outside the per-call jitted path).

    weight: (F_out, F_in) in PyTorch nn.Linear convention.
    Returns (wt, b2d) with wt = (F_in, F_out) so the kernel does y = x @ wt + b.
    """
    return weight.T, bias.reshape(1, -1)


@functools.partial(jax.jit, static_argnames=("tm",))
def context_gating(x, wt, b2d, *, tm=1024):
    """x: [..., F]; wt: (F_in, F_out) pre-transposed weight; b2d: (1, F)."""
    orig_shape = x.shape
    F = orig_shape[-1]
    x2d = x.reshape(-1, F)
    M = x2d.shape[0]

    # Row tile: multiple of 16 (satisfies the sublane constraint for both f32
    # and bf16), capped at `tm`. Pad M up to a whole number of tiles so every
    # grid step sees a full block; padded rows are sliced off afterwards.
    tm_eff = min(tm, _round_up(M, 16))
    m_pad = _round_up(M, tm_eff)
    if m_pad != M:
        x2d = jnp.pad(x2d, ((0, m_pad - M), (0, 0)))

    grid = (m_pad // tm_eff,)

    # TODO(synk): with F=32 the output is lane-sparse (32 of 128 lanes); in
    # production either pad F to 128 or batch 4 gating heads per feature block.
    out = pl.pallas_call(
        _context_gating_kernel,
        out_shape=jax.ShapeDtypeStruct((m_pad, F), x.dtype),
        grid_spec=pltpu.PrefetchScalarGridSpec(
            num_scalar_prefetch=0,
            grid=grid,
            in_specs=[
                pl.BlockSpec((tm_eff, F), lambda i: (i, 0)),  # x row tile
                pl.BlockSpec((F, F), lambda i: (0, 0)),       # weight, resident
                pl.BlockSpec((1, F), lambda i: (0, 0)),       # bias, resident
            ],
            out_specs=pl.BlockSpec((tm_eff, F), lambda i: (i, 0)),
        ),
        compiler_params=pltpu.CompilerParams(
            dimension_semantics=("parallel",),   # rows are independent
            vmem_limit_bytes=64 << 20,
        ),
    )(x2d, wt, b2d)

    if m_pad != M:
        out = out[:M]
    return out.reshape(orig_shape)


def _reference(x, weight, bias):
    lin = jnp.einsum("...i,oi->...o", x, weight) + bias
    return x * jax.nn.sigmoid(lin)


if __name__ == "__main__":
    key = jax.random.PRNGKey(0)
    B, T, F = 2, 8, 32          # input_num = 32

    k_x, k_w, k_b = jax.random.split(key, 3)
    x = jax.random.normal(k_x, (B, T, F), dtype=jnp.float32)

    # Deterministic PyTorch-style nn.Linear init: U(-1/sqrt(in), 1/sqrt(in))
    bound = 1.0 / jnp.sqrt(jnp.float32(F))
    weight = jax.random.uniform(k_w, (F, F), minval=-bound, maxval=bound,
                                dtype=jnp.float32)     # (out, in)
    bias = jax.random.uniform(k_b, (F,), minval=-bound, maxval=bound,
                              dtype=jnp.float32)

    # One-time parameter prep (transpose hoisted out of the per-call path).
    wt, b2d = prepare_params(weight, bias)
    wt = jax.block_until_ready(wt)

    out = context_gating(x, wt, b2d)
    out = jax.block_until_ready(out)

    ref = _reference(x, weight, bias)
    assert out.shape == x.shape
    assert jnp.allclose(out, ref, atol=1e-5, rtol=1e-5), "mismatch vs reference"

    print("KERNEL_OK")
</pallas_src>

<mosaic_0001>
module attributes {stable_mosaic.version = 11 : i64} {
  func.func @_context_gating_kernel(%arg0: i32, %arg1: memref<16x32xf32, #tpu.memory_space<vmem>>, %arg2: memref<32x32xf32, #tpu.memory_space<vmem>>, %arg3: memref<1x32xf32, #tpu.memory_space<vmem>>, %arg4: memref<16x32xf32, #tpu.memory_space<vmem>>) attributes {dimension_semantics = [#tpu.dimension_semantics<parallel>], iteration_bounds = array<i64: 1>, scalar_prefetch = 0 : i64, scratch_operands = 0 : i64, tpu.core_type = #tpu.core_type<tc>, window_params = [{transform_indices = @transform_0, window_bounds = array<i64: 16, 32>}, {pipeline_mode = #tpu.pipeline_mode<synchronous>, transform_indices = @transform_1, window_bounds = array<i64: 32, 32>}, {pipeline_mode = #tpu.pipeline_mode<synchronous>, transform_indices = @transform_2, window_bounds = array<i64: 1, 32>}, {transform_indices = @transform_3, window_bounds = array<i64: 16, 32>}]} {
    %c0 = arith.constant 0 : index
    %c0_0 = arith.constant 0 : index
    %0 = vector.load %arg1[%c0, %c0_0] : memref<16x32xf32, #tpu.memory_space<vmem>>, vector<16x32xf32>
    %c0_1 = arith.constant 0 : index
    %c0_2 = arith.constant 0 : index
    %1 = vector.load %arg2[%c0_1, %c0_2] : memref<32x32xf32, #tpu.memory_space<vmem>>, vector<32x32xf32>
    %cst = arith.constant dense<0.000000e+00> : vector<16x32xf32>
    %2 = tpu.matmul %0, %1, %cst {dimension_numbers = #tpu.dot_dimension_numbers<[1], [0], [0], [1], [0, 0, 1, 1], [], []>} : vector<16x32xf32>, vector<32x32xf32>, vector<16x32xf32> -> vector<16x32xf32>
    %c0_3 = arith.constant 0 : index
    %c0_4 = arith.constant 0 : index
    %3 = vector.load %arg3[%c0_3, %c0_4] : memref<1x32xf32, #tpu.memory_space<vmem>>, vector<1x32xf32>
    %4 = vector.broadcast %3 : vector<1x32xf32> to vector<16x32xf32>
    %5 = arith.addf %2, %4 : vector<16x32xf32>
    %6 = arith.negf %5 : vector<16x32xf32>
    %7 = math.exp %6 : vector<16x32xf32>
    %cst_5 = arith.constant 1.000000e+00 : f32
    %8 = vector.broadcast %cst_5 : f32 to vector<16x32xf32>
    %9 = arith.addf %8, %7 : vector<16x32xf32>
    %10 = arith.divf %8, %9 : vector<16x32xf32>
    %11 = arith.mulf %0, %10 : vector<16x32xf32>
    %c0_6 = arith.constant 0 : index
    %c0_7 = arith.constant 0 : index
    %12 = vector.load %arg4[%c0_6, %c0_7] : memref<16x32xf32, #tpu.memory_space<vmem>>, vector<16x32xf32>
    tpu.vector_store %arg4[%c0_6, %c0_7], %11 {strides = array<i32>} : memref<16x32xf32, #tpu.memory_space<vmem>>, vector<16x32xf32>,
    return
  }
  func.func @transform_0(%arg0: i32) -> (i32, i32) {
    %c0_i32 = arith.constant 0 : i32
    %c0_i32_0 = arith.constant 0 : i32
    return %arg0, %c0_i32 : i32, i32
  }
  func.func @transform_1(%arg0: i32) -> (i32, i32) {
    %c0_i32 = arith.constant 0 : i32
    %c0_i32_0 = arith.constant 0 : i32
    %c0_i32_1 = arith.constant 0 : i32
    return %c0_i32, %c0_i32_0 : i32, i32
  }
  func.func @transform_2(%arg0: i32) -> (i32, i32) {
    %c0_i32 = arith.constant 0 : i32
    %c0_i32_0 = arith.constant 0 : i32
    %c0_i32_1 = arith.constant 0 : i32
    return %c0_i32, %c0_i32_0 : i32, i32
  }
  func.func @transform_3(%arg0: i32) -> (i32, i32) {
    %c0_i32 = arith.constant 0 : i32
    %c0_i32_0 = arith.constant 0 : i32
    return %arg0, %c0_i32 : i32, i32
  }
}

</mosaic_0001>

<llo_original>
// kernel: context_gating.1
$region0: #{context_gating.1}
  #allocation0 [shape = 'u32[]', space=smem, size = 0x4, offset = 0x4, fixed_abs, tag = 'smem constant byte address 0x4 - core index']
  #allocation1 [shape = 'u32[144,128]{1,0:T(1,128)}', space=vmem, size = 0x12000, scoped, tag = 'internal scratch']
  %s0 = inlined_call_operand.hbm [shape: f32[16,32], index: 0, kind: input, shape index: {}]
  %s1 = inlined_call_operand.hbm [shape: f32[32,32], index: 1, kind: input, shape index: {}]
  %s2 = inlined_call_operand.hbm [shape: f32[1,32], index: 2, kind: input, shape index: {}]
  %s3 = inlined_call_operand.hbm [shape: f32[16,32], index: 3, kind: output, shape index: {}]
  %s4 = sld [smem:[#allocation0]]
  $region34: #{context_gating.1} parent=0
    _
  %s6 = ssub.s32 1, %s4
  %s7 = scalar_select 0, %s6, %s4
  $region1: #{context_gating.1} parent=0
    #allocation2 [shape = 'u8[8192]{0}', space=vmem, size = 0x2000, scoped, tag = 'input window, operand 0, single buffered']
    #allocation3 [shape = 's32[1]{0}', space=sflag, size = 0x4, scoped, tag = 'scoped memory for context_gating.1']
    #allocation4 [shape = 's32[1]{0}', space=sflag, size = 0x4, scoped, tag = 'scoped memory for context_gating.1']
    #allocation5 [shape = 'u8[16384]{0}', space=vmem, size = 0x4000, scoped, tag = 'input window, operand 1, single buffered']
    #allocation6 [shape = 's32[1]{0}', space=sflag, size = 0x4, scoped, tag = 'scoped memory for context_gating.1']
    #allocation7 [shape = 'u8[512]{0}', space=vmem, size = 0x400, scoped, tag = 'input window, operand 2, single buffered']
    #allocation8 [shape = 'u8[8192]{0}', space=vmem, size = 0x2000, scoped, tag = 'output window, operand 0, single buffered']
    %8 = vsyncpa [#allocation3], 0
    %9 = vsyncpa [#allocation6], 0
    %10 = vsyncpa [#allocation4], 0
    // Predicated region
    $region2: #{context_gating.1} parent=1 // pred_check
      _
    $region3: #{context_gating.1} parent=1 // pred_check_branch
      %12 = sbr.rel (0) target = $region5
    $region4: #{context_gating.1} parent=1 // pred_region
      %s14 = ssub.s32 256, 256
      %15 = vsyncadd [#allocation3], %s14
      %s16 = sshll.u32 [#allocation2], 4
      %s17 = int_to_ptr.vmem [resolvable:$true] %s16
      %22 = dma.hbm_to_vmem [thread:$0]  %s0, 256, %s17, [#allocation3], 128, 128, 8
    $region5: #{context_gating.1} parent=1 // pred_fallthru
      _
    // Predicated region
    $region6: #{context_gating.1} parent=1 // pred_check
      _
    $region7: #{context_gating.1} parent=1 // pred_check_branch
      %24 = sbr.rel (0) target = $region9
    $region8: #{context_gating.1} parent=1 // pred_region
      %s26 = ssub.s32 512, 512
      %27 = vsyncadd [#allocation6], %s26
      %s28 = sshll.u32 [#allocation5], 4
      %s29 = int_to_ptr.vmem [resolvable:$true] %s28
      %34 = dma.hbm_to_vmem [thread:$0]  %s1, 512, %s29, [#allocation6], 128, 128, 8
    $region9: #{context_gating.1} parent=1 // pred_fallthru
      _
    // Predicated region
    $region10: #{context_gating.1} parent=1 // pred_check
      _
    $region11: #{context_gating.1} parent=1 // pred_check_branch
      %36 = sbr.rel (0) target = $region13
    $region12: #{context_gating.1} parent=1 // pred_region
      %s38 = ssub.s32 16, 16
      %39 = vsyncadd [#allocation6], %s38
      %s41 = sshll.u32 [#allocation7], 4
      %s42 = int_to_ptr.vmem [resolvable:$true] %s41
      %44 = dma.hbm_to_vmem [thread:$0]  %s2, 16, %s42, [#allocation6]
    $region13: #{context_gating.1} parent=1 // pred_fallthru
      _
    // Predicated region
    $region14: #{context_gating.1} parent=1 // pred_check
      _
    $region15: #{context_gating.1} parent=1 // pred_check_branch
      %46 = sbr.rel (0) target = $region17
    $region16: #{context_gating.1} parent=1 // pred_region
      %47 = dma.done [#allocation3], 256
    $region17: #{context_gating.1} parent=1 // pred_fallthru
      _
    // Predicated region
    $region18: #{context_gating.1} parent=1 // pred_check
      _
    $region19: #{context_gating.1} parent=1 // pred_check_branch
      %49 = sbr.rel (0) target = $region21
    $region20: #{context_gating.1} parent=1 // pred_region
      %50 = dma.done [#allocation6], 512
    $region21: #{context_gating.1} parent=1 // pred_fallthru
      _
    // Predicated region
    $region22: #{context_gating.1} parent=1 // pred_check
      _
    $region23: #{context_gating.1} parent=1 // pred_check_branch
      %52 = sbr.rel (0) target = $region25
    $region24: #{context_gating.1} parent=1 // pred_region
      %53 = dma.done [#allocation6], 16
    $region25: #{context_gating.1} parent=1 // pred_fallthru
      _
    %v54 = vld [vmem:[#allocation2] sm:$0xff]
    %v55 = vld [vmem:[#allocation2 + $0x8] sm:$0xff]
    %v56 = vld [vmem:[#allocation5] sm:$0xff]
    %v57 = vld [vmem:[#allocation5 + $0x8] sm:$0xff]
    %v58 = vld [vmem:[#allocation5 + $0x10] sm:$0xff]
    %v59 = vld [vmem:[#allocation5 + $0x18] sm:$0xff]
    %v60 = vld [vmem:[#allocation7] sm:$0x1]
    %v62 = vlaneseq
    %v63 = vshrl.u32 %v62, 7
    %v64 = vsub.s32 0, %v63
    %v65 = vrot.slane %v60, %v64
    %vm67 = vcmask 261120
    %v69 = vsel %vm67, %v54, 0
    %v72 = vsel %vm67, %v55, 0
    %74 = vmatprep.subr.mxu0 0.0
    %75 = vmatpush1.msra.mxu0 %v56
    %76 = vmatprep.subr.mxu0 0.0
    %77 = vmatpush1.msra.mxu0 %v57
    %78 = vmatprep.subr.mxu0 0.0
    %79 = vmatpush1.msra.mxu0 %v58
    %80 = vmatprep.subr.mxu0 0.0
    %81 = vmatpush1.msra.mxu0 %v59
    %82 = vmatprep.subr.mxu0 0.0
    %83 = vmatpush1.msra.mxu0 0.0
    %84 = vmatprep.subr.mxu0 0.0
    %85 = vmatpush1.msra.mxu0 0.0
    %86 = vmatprep.subr.mxu0 0.0
    %87 = vmatpush1.msra.mxu0 0.0
    %88 = vmatprep.subr.mxu0 0.0
    %89 = vmatpush1.msra.mxu0 0.0
    %90 = vmatprep.subr.mxu0 0.0
    %91 = vmatpush1.msra.mxu0 0.0
    %92 = vmatprep.subr.mxu0 0.0
    %93 = vmatpush1.msra.mxu0 0.0
    %94 = vmatprep.subr.mxu0 0.0
    %95 = vmatpush1.msra.mxu0 0.0
    %96 = vmatprep.subr.mxu0 0.0
    %97 = vmatpush1.msra.mxu0 0.0
    %98 = vmatprep.subr.mxu0 0.0
    %99 = vmatpush1.msra.mxu0 0.0
    %100 = vmatprep.subr.mxu0 0.0
    %101 = vmatpush1.msra.mxu0 0.0
    %102 = vmatprep.subr.mxu0 0.0
    %103 = vmatpush1.msra.mxu0 0.0
    %104 = vmatprep.subr.mxu0 0.0
    %105 = vmatpush1.msra.mxu0 0.0
    %106 = vmatprep.subr.mxu0 0.0
    %107 = vmatpush1.msra.mxu0 0.0
    %108 = vmatprep.subr.mxu0 0.0
    %109 = vmatpush1.msra.mxu0 0.0
    %110 = vmatprep.subr.mxu0 0.0
    %111 = vmatpush1.msra.mxu0 0.0
    %112 = vmatprep.subr.mxu0 0.0
    %113 = vmatpush1.msra.mxu0 0.0
    %114 = vmatprep.subr.mxu0 0.0
    %115 = vmatpush1.msra.mxu0 0.0
    %116 = vmatprep.subr.mxu0 0.0
    %117 = vmatpush1.msra.mxu0 0.0
    %118 = vmatprep.subr.mxu0 0.0
    %119 = vmatpush1.msra.mxu0 0.0
    %120 = vmatprep.subr.mxu0 0.0
    %121 = vmatpush1.msra.mxu0 0.0
    %122 = vmatprep.subr.mxu0 0.0
    %123 = vmatpush1.msra.mxu0 0.0
    %124 = vmatprep.subr.mxu0 0.0
    %125 = vmatpush1.msra.mxu0 0.0
    %126 = vmatprep.subr.mxu0 0.0
    %127 = vmatpush1.msra.mxu0 0.0
    %128 = vmatprep.subr.mxu0 0.0
    %129 = vmatpush1.msra.mxu0 0.0
    %130 = vmatprep.subr.mxu0 0.0
    %131 = vmatpush1.msra.mxu0 0.0
    %132 = vmatprep.subr.mxu0 0.0
    %133 = vmatpush1.msra.mxu0 0.0
    %134 = vmatprep.subr.mxu0 0.0
    %135 = vmatpush1.msra.mxu0 0.0
    %136 = vmatprep.subr.mxu0 0.0
    %137 = vmatpush1.msra.mxu0 0.0
    %138 = vmatprep.mubr.f32.mxu0 0.0
    %139 = vmatmul.mubr.f32.gmra.mrb[0].mxu0 %v69
    %v140 = vpop.f32.mrb[0].mxu0
    %v141 = vadd.f32 %v65, %v140
    %v142 = vpop.f32.mrb[0].mxu0
    %143 = vmatprep.mubr.f32.mxu0 0.0
    %144 = vmatmul.mubr.f32.gmra.mrb[0].mxu0 %v72
    %v145 = vpop.f32.mrb[0].mxu0
    %v146 = vadd.f32 %v65, %v145
    %v147 = vpop.f32.mrb[0].mxu0
    %148 = vdwg.mxu0
    %v149 = vxor.u32 %v141, 2147483648
    %v150 = vxor.u32 %v146, 2147483648
    %v151 = vmul.f32 %v149, 1.442695
    %v152 = vpow.pop %v151
    %v153 = vmul.f32 %v150, 1.442695
    %v154 = vpow.pop %v153
    %v155 = vadd.f32 %v152, 1.0
    %v156 = vadd.f32 %v154, 1.0
    %v157 = vrcp.pop %v155
    %v158 = vmul.f32 1.0, %v157
    %v159 = vrcp.pop %v156
    %v160 = vmul.f32 1.0, %v159
    %v161 = vmul.f32 %v54, %v158
    %v162 = vmul.f32 %v55, %v160
    %163 = vst.msk [vmem:[#allocation8] sm:$0xff] %vm67, %v161
    %164 = vst.msk [vmem:[#allocation8 + $0x8] sm:$0xff] %vm67, %v162
    // Predicated region
    $region26: #{context_gating.1} parent=1 // pred_check
      _
    $region27: #{context_gating.1} parent=1 // pred_check_branch
      %166 = sbr.rel (0) target = $region29
    $region28: #{context_gating.1} parent=1 // pred_region
      %s168 = ssub.s32 256, 256
      %169 = vsyncadd [#allocation4], %s168
      %s170 = sshll.u32 [#allocation8], 4
      %s171 = int_to_ptr.vmem [resolvable:$true] %s170
      %176 = dma.vmem_to_hbm [thread:$0]  %s171, 256, %s3, [#allocation4], 128, 128, 8
    $region29: #{context_gating.1} parent=1 // pred_fallthru
      _
    // Predicated region
    $region30: #{context_gating.1} parent=1 // pred_check
      _
    $region31: #{context_gating.1} parent=1 // pred_check_branch
      %178 = sbr.rel (0) target = $region33
    $region32: #{context_gating.1} parent=1 // pred_region
      %179 = dma.done [#allocation4], 256
    $region33: #{context_gating.1} parent=1 // pred_fallthru
      _
    %180 = vsyncpa [#allocation3], 1
    %181 = vsyncpa [#allocation6], 1
    %182 = vsyncpa [#allocation4], 1

</llo_original>
